<compile_context>
chip_gen: v5e
topology: v5e:2x2
jax: 0.10.0
libtpu: 0.0.40
codegen_flags: <defaults>
</compile_context>

<pallas_src>
import math
import functools

import jax
import jax.numpy as jnp
from jax.experimental import pallas as pl
from jax.experimental.pallas import tpu as pltpu


_NEG_INF = -1e30  # finite mask value: bf16/f32-safe, no inf-inf NaN

# Generation-aware scoped-VMEM limit: ~48 MB on v7x (64 MiB physical),
# ~96 MB on v5e/v6e (128 MiB physical).
try:
    _VMEM_CAP = int(pltpu.get_tpu_info().vmem_capacity_bytes)
except Exception:  # pragma: no cover - conservative fallback
    _VMEM_CAP = 64 * 1024 * 1024
_VMEM_LIMIT = min(_VMEM_CAP * 3 // 4, 100 * 1024 * 1024)


def _pick_tile(n, target, align):
    """Largest multiple of `align` that divides n and is <= target, else n."""
    if n <= target:
        return n
    if n % align != 0:
        return n
    t = (min(target, n) // align) * align
    while t >= align and n % t != 0:
        t -= align
    return t if t >= align else n


# ----------------------------- in-kernel helpers -----------------------------

def _layernorm(x, g, b, eps=1e-5):
    # f32 statistics
    mu = jnp.mean(x, axis=-1, keepdims=True)
    xc = x - mu
    var = jnp.mean(xc * xc, axis=-1, keepdims=True)
    return xc * jax.lax.rsqrt(var + eps) * g + b


def _gelu_tanh(x):
    c = math.sqrt(2.0 / math.pi)
    return 0.5 * x * (1.0 + jnp.tanh(c * (x + 0.044715 * x * x * x)))


# ----------------------- fused LayerNorm + Linear (QKV) -----------------------

def ln_linear_kernel(x_ref, g_ref, b_ref, w_ref, bias_ref, o_ref, h_ref):
    # LN + f32->bf16 cast of the row tile only once per row tile (j == 0),
    # reused for every output column tile j.
    @pl.when(pl.program_id(1) == 0)
    def _():
        xf = x_ref[...].astype(jnp.float32)
        h_ref[...] = _layernorm(xf, g_ref[...], b_ref[...]).astype(jnp.bfloat16)

    y = jnp.dot(h_ref[...], w_ref[...], preferred_element_type=jnp.float32)
    o_ref[...] = (y + bias_ref[...]).astype(o_ref.dtype)


def ln_linear(x2d, g, b, w, bias):
    M, C = x2d.shape
    N = w.shape[1]
    tm = _pick_tile(M, 256, 128)
    tn = _pick_tile(N, 1024, 128)
    grid = (M // tm, N // tn)
    return pl.pallas_call(
        ln_linear_kernel,
        out_shape=jax.ShapeDtypeStruct((M, N), jnp.bfloat16),
        grid=grid,
        in_specs=[
            pl.BlockSpec((tm, C), lambda i, j: (i, 0)),
            pl.BlockSpec((1, C), lambda i, j: (0, 0)),
            pl.BlockSpec((1, C), lambda i, j: (0, 0)),
            pl.BlockSpec((C, tn), lambda i, j: (0, j)),
            pl.BlockSpec((1, tn), lambda i, j: (0, j)),
        ],
        out_specs=pl.BlockSpec((tm, tn), lambda i, j: (i, j)),
        scratch_shapes=[pltpu.VMEM((tm, C), jnp.bfloat16)],
        compiler_params=pltpu.CompilerParams(
            # j carries the LN'd scratch tile -> "arbitrary"
            dimension_semantics=("parallel", "arbitrary"),
            vmem_limit_bytes=_VMEM_LIMIT),
    )(x2d, g, b, w, bias)


# ------------------- Linear + bias + residual add (attn c_proj) ---------------

def linear_residual_kernel(x_ref, w_ref, bias_ref, res_ref, o_ref):
    y = jnp.dot(x_ref[...], w_ref[...], preferred_element_type=jnp.float32)
    y = y + bias_ref[...] + res_ref[...].astype(jnp.float32)
    o_ref[...] = y.astype(o_ref.dtype)


def linear_residual(x2d, w, bias, res2d):
    M, K = x2d.shape
    N = w.shape[1]
    tm = _pick_tile(M, 256, 128)
    tn = _pick_tile(N, 1024, 128)
    grid = (M // tm, N // tn)
    return pl.pallas_call(
        linear_residual_kernel,
        out_shape=jax.ShapeDtypeStruct((M, N), jnp.bfloat16),
        grid=grid,
        in_specs=[
            pl.BlockSpec((tm, K), lambda i, j: (i, 0)),
            pl.BlockSpec((K, tn), lambda i, j: (0, j)),
            pl.BlockSpec((1, tn), lambda i, j: (0, j)),
            pl.BlockSpec((tm, tn), lambda i, j: (i, j)),
        ],
        out_specs=pl.BlockSpec((tm, tn), lambda i, j: (i, j)),
        compiler_params=pltpu.CompilerParams(
            dimension_semantics=("parallel", "parallel"),
            vmem_limit_bytes=_VMEM_LIMIT),
    )(x2d, w, bias, res2d)


# ------------------------ fully fused MLP block (+ residual) ------------------

def mlp_block_kernel(x_ref, g_ref, b_ref, wfc_ref, bfc_ref, wpr_ref, bpr_ref, o_ref):
    xf = x_ref[...].astype(jnp.float32)                       # (tm, C)
    h = _layernorm(xf, g_ref[...], b_ref[...]).astype(jnp.bfloat16)
    hid = jnp.dot(h, wfc_ref[...], preferred_element_type=jnp.float32)
    hid = _gelu_tanh(hid + bfc_ref[...]).astype(jnp.bfloat16)  # (tm, 4C), stays in VMEM
    y = jnp.dot(hid, wpr_ref[...], preferred_element_type=jnp.float32)
    o_ref[...] = (xf + y + bpr_ref[...]).astype(o_ref.dtype)


def mlp_block(x2d, g, b, w_fc, b_fc, w_proj2, b_proj2):
    M, C = x2d.shape
    H = w_fc.shape[1]
    tm = _pick_tile(M, 256, 128)
    grid = (M // tm,)
    return pl.pallas_call(
        mlp_block_kernel,
        out_shape=jax.ShapeDtypeStruct((M, C), jnp.bfloat16),
        grid=grid,
        in_specs=[
            pl.BlockSpec((tm, C), lambda i: (i, 0)),
            pl.BlockSpec((1, C), lambda i: (0, 0)),
            pl.BlockSpec((1, C), lambda i: (0, 0)),
            pl.BlockSpec((C, H), lambda i: (0, 0)),
            pl.BlockSpec((1, H), lambda i: (0, 0)),
            pl.BlockSpec((H, C), lambda i: (0, 0)),
            pl.BlockSpec((1, C), lambda i: (0, 0)),
        ],
        out_specs=pl.BlockSpec((tm, C), lambda i: (i, 0)),
        compiler_params=pltpu.CompilerParams(
            dimension_semantics=("parallel",),
            vmem_limit_bytes=_VMEM_LIMIT),
    )(x2d, g, b, w_fc, b_fc, w_proj2, b_proj2)


# ---------------------- flash-style causal self-attention ---------------------
# Head-major: grid (B, n_head, q_tiles, kv_tiles); q/k/v are (B, nh, T, hd).
# The 1/sqrt(hd) scale is folded into the QKV projection weights at init.

def flash_attn_kernel(q_ref, k_ref, v_ref, o_ref, m_ref, l_ref, acc_ref, *, tq, tk):
    qi = pl.program_id(2)
    ki = pl.program_id(3)

    @pl.when(ki == 0)
    def _init():
        m_ref[...] = jnp.full_like(m_ref, _NEG_INF)
        l_ref[...] = jnp.zeros_like(l_ref)
        acc_ref[...] = jnp.zeros_like(acc_ref)

    # Skip compute for KV tiles entirely above the causal diagonal
    # (their DMA is already skipped via the clamped index_map).
    @pl.when(ki * tk <= qi * tq + (tq - 1))
    def _compute():
        q = q_ref[0, 0]                      # (tq, hd) bf16 (pre-scaled)
        k = k_ref[0, 0]                      # (tk, hd) bf16
        v = v_ref[0, 0]                      # (tk, hd) bf16
        s = jax.lax.dot_general(q, k, (((1,), (1,)), ((), ())),
                                preferred_element_type=jnp.float32)   # (tq, tk)
        row = qi * tq + jax.lax.broadcasted_iota(jnp.int32, (tq, tk), 0)
        col = ki * tk + jax.lax.broadcasted_iota(jnp.int32, (tq, tk), 1)
        s = jnp.where(col <= row, s, _NEG_INF)
        m_prev = m_ref[...]                                           # (tq, 1)
        m_new = jnp.maximum(m_prev, jnp.max(s, axis=-1, keepdims=True))
        alpha = jnp.exp(m_prev - m_new)
        p = jnp.exp(s - m_new)                                        # f32 probs
        l_ref[...] = alpha * l_ref[...] + jnp.sum(p, axis=-1, keepdims=True)
        acc_ref[...] = alpha * acc_ref[...] + jnp.dot(
            p.astype(jnp.bfloat16), v, preferred_element_type=jnp.float32)
        m_ref[...] = m_new

    @pl.when(ki == pl.num_programs(3) - 1)
    def _finalize():
        o_ref[0, 0] = (acc_ref[...] *
                       pl.reciprocal(l_ref[...], approx=True)).astype(o_ref.dtype)


def flash_attention(q, k, v):
    B, NH, T, HD = q.shape
    tq = _pick_tile(T, 256, 128)
    tk = _pick_tile(T, 256, 128)
    grid = (B, NH, T // tq, T // tk)

    def kv_index(b, h, qi, ki):
        # Clamp to the last causally-valid KV tile: identical block index across
        # fully-masked steps => Pallas skips the (useless) K/V DMAs.
        last_valid = (qi * tq + (tq - 1)) // tk
        return (b, h, jnp.minimum(ki, last_valid), 0)

    kernel = functools.partial(flash_attn_kernel, tq=tq, tk=tk)
    return pl.pallas_call(
        kernel,
        out_shape=jax.ShapeDtypeStruct((B, NH, T, HD), jnp.bfloat16),
        grid=grid,
        in_specs=[
            pl.BlockSpec((1, 1, tq, HD), lambda b, h, qi, ki: (b, h, qi, 0)),
            pl.BlockSpec((1, 1, tk, HD), kv_index),
            pl.BlockSpec((1, 1, tk, HD), kv_index),
        ],
        out_specs=pl.BlockSpec((1, 1, tq, HD), lambda b, h, qi, ki: (b, h, qi, 0)),
        scratch_shapes=[
            pltpu.VMEM((tq, 1), jnp.float32),    # running max
            pltpu.VMEM((tq, 1), jnp.float32),    # running denom
            pltpu.VMEM((tq, HD), jnp.float32),   # output accumulator
        ],
        compiler_params=pltpu.CompilerParams(
            dimension_semantics=("parallel", "parallel", "parallel", "arbitrary"),
            vmem_limit_bytes=_VMEM_LIMIT),
    )(q, k, v)


# ------------------- final layernorm + tied (vocab-tiled) lm_head -------------

def lnf_lmhead_kernel(x_ref, g_ref, b_ref, w_ref, o_ref, h_ref):
    @pl.when(pl.program_id(1) == 0)
    def _():
        xf = x_ref[...].astype(jnp.float32)
        h_ref[...] = _layernorm(xf, g_ref[...], b_ref[...]).astype(jnp.bfloat16)
    # pre-transposed bf16 (C, Vp) tied weight -> plain (K,N) matmul, f32 acc
    o_ref[...] = jnp.dot(h_ref[...], w_ref[...], preferred_element_type=jnp.float32)


def lnf_lmhead(x2d, g, b, wte_T):
    M, C = x2d.shape
    Vp = wte_T.shape[1]                 # padded to a multiple of 128 (lane-dense)
    tm = _pick_tile(M, 256, 128)
    tv = _pick_tile(Vp, 512, 128)
    grid = (M // tm, Vp // tv)
    return pl.pallas_call(
        lnf_lmhead_kernel,
        out_shape=jax.ShapeDtypeStruct((M, Vp), jnp.float32),
        grid=grid,
        in_specs=[
            pl.BlockSpec((tm, C), lambda i, j: (i, 0)),
            pl.BlockSpec((1, C), lambda i, j: (0, 0)),
            pl.BlockSpec((1, C), lambda i, j: (0, 0)),
            pl.BlockSpec((C, tv), lambda i, j: (0, j)),
        ],
        out_specs=pl.BlockSpec((tm, tv), lambda i, j: (i, j)),
        scratch_shapes=[pltpu.VMEM((tm, C), jnp.bfloat16)],
        compiler_params=pltpu.CompilerParams(
            dimension_semantics=("parallel", "arbitrary"),
            vmem_limit_bytes=_VMEM_LIMIT),
    )(x2d, g, b, wte_T)


# ----------------------------- parameter init --------------------------------

def init_params(key, vocab_size, block_size, n_layer, n_head, n_embd):
    std = 0.02
    proj_std = 0.02 * (2 * n_layer) ** -0.5     # NANOGPT_SCALE_INIT on c_proj layers
    hd = n_embd // n_head
    attn_scale = 1.0 / math.sqrt(hd)
    v_pad = ((vocab_size + 127) // 128) * 128   # pad vocab once for lane-dense lm_head
    keys = jax.random.split(key, 2 + 4 * n_layer)
    ki = iter(keys)

    params = {"vocab_size": vocab_size, "n_head": n_head}
    wte = std * jax.random.normal(next(ki), (vocab_size, n_embd), jnp.float32)
    params["wte"] = wte                                         # f32 gather table
    # Tied lm_head weight: padded, pre-transposed, bf16 (one-time copy at init).
    wte_pad = jnp.zeros((v_pad, n_embd), jnp.float32).at[:vocab_size].set(wte)
    params["wte_lmhead_T"] = wte_pad.T.astype(jnp.bfloat16)     # (C, Vp)
    params["wpe"] = std * jax.random.normal(next(ki), (block_size, n_embd), jnp.float32)

    blocks = []
    for _ in range(n_layer):
        w_qkv = std * jax.random.normal(next(ki), (n_embd, 3 * n_embd), jnp.float32)
        # Fold 1/sqrt(hd) into the Q projection (weights + bias) once at init.
        w_qkv = w_qkv.at[:, :n_embd].multiply(attn_scale)
        b_qkv = jnp.zeros((1, 3 * n_embd), jnp.float32)
        blk = dict(
            ln1_g=jnp.ones((1, n_embd), jnp.float32),
            ln1_b=jnp.zeros((1, n_embd), jnp.float32),
            w_qkv=w_qkv.astype(jnp.bfloat16),
            b_qkv=b_qkv,
            w_proj=(proj_std * jax.random.normal(next(ki), (n_embd, n_embd),
                                                 jnp.float32)).astype(jnp.bfloat16),
            b_proj=jnp.zeros((1, n_embd), jnp.float32),
            ln2_g=jnp.ones((1, n_embd), jnp.float32),
            ln2_b=jnp.zeros((1, n_embd), jnp.float32),
            w_fc=(std * jax.random.normal(next(ki), (n_embd, 4 * n_embd),
                                          jnp.float32)).astype(jnp.bfloat16),
            b_fc=jnp.zeros((1, 4 * n_embd), jnp.float32),
            w_proj2=(proj_std * jax.random.normal(next(ki), (4 * n_embd, n_embd),
                                                  jnp.float32)).astype(jnp.bfloat16),
            b_proj2=jnp.zeros((1, n_embd), jnp.float32),
        )
        blocks.append(blk)
    params["blocks"] = blocks
    params["ln_f_g"] = jnp.ones((1, n_embd), jnp.float32)
    params["ln_f_b"] = jnp.zeros((1, n_embd), jnp.float32)
    return params


# ------------------------------- GPT forward ---------------------------------

def gpt_forward(idx, params):
    B, T = idx.shape
    n_head = params["n_head"]
    C = params["wpe"].shape[1]
    hd = C // n_head
    V = params["vocab_size"]

    # glue: embedding gathers (data-dependent indexing) in plain JAX
    tok = jnp.take(params["wte"], idx, axis=0)                 # (B, T, C) f32
    pos = params["wpe"][:T][None, :, :]                        # (1, T, C) f32
    x2 = (tok + pos).astype(jnp.bfloat16).reshape(B * T, C)    # bf16 residual stream

    for blk in params["blocks"]:
        # x = x + attn(ln_1(x))
        qkv = ln_linear(x2, blk["ln1_g"], blk["ln1_b"], blk["w_qkv"], blk["b_qkv"])
        # head-major relayout (XLA glue; replaces the previous per-tensor slice copies)
        # TODO(synk): read q/k/v blocks straight from the (B,T,3C) qkv tensor once
        # sub-128-lane block last-dims are acceptable, removing these transposes.
        qkv4 = qkv.reshape(B, T, 3, n_head, hd)
        q = jnp.transpose(qkv4[:, :, 0], (0, 2, 1, 3))          # (B, nh, T, hd) bf16
        k = jnp.transpose(qkv4[:, :, 1], (0, 2, 1, 3))
        v = jnp.transpose(qkv4[:, :, 2], (0, 2, 1, 3))
        y = flash_attention(q, k, v)                            # (B, nh, T, hd) bf16
        y = jnp.transpose(y, (0, 2, 1, 3)).reshape(B * T, C)
        x2 = linear_residual(y, blk["w_proj"], blk["b_proj"], x2)
        # x = x + mlp(ln_2(x))   (single fused kernel; no HBM round trip of 4C hidden)
        x2 = mlp_block(x2, blk["ln2_g"], blk["ln2_b"], blk["w_fc"], blk["b_fc"],
                       blk["w_proj2"], blk["b_proj2"])

    logits_pad = lnf_lmhead(x2, params["ln_f_g"], params["ln_f_b"],
                            params["wte_lmhead_T"])             # (B*T, Vp) f32
    # NOTE: a fused loss path should consume the padded logits with the pad
    # columns masked instead of materializing this slice.
    return logits_pad[:, :V].reshape(B, T, V)


# ----------------------------------- main -------------------------------------

if __name__ == "__main__":
    # Small config consistent with GPTconfig (scaled down for the demo).
    vocab_size = 65
    block_size = 64
    n_layer = 2
    n_head = 2
    n_embd = 64
    B, T = 2, 16

    key = jax.random.PRNGKey(0)
    k_params, k_idx = jax.random.split(key)
    params = init_params(k_params, vocab_size, block_size, n_layer, n_head, n_embd)
    idx = jax.random.randint(k_idx, (B, T), 0, vocab_size, dtype=jnp.int32)

    logits = gpt_forward(idx, params)
    logits = jax.block_until_ready(logits)

    assert logits.shape == (B, T, vocab_size), logits.shape
    assert logits.dtype == jnp.float32
    assert bool(jnp.all(jnp.isfinite(logits)))
    # TODO(synk): cross-entropy loss path (targets is not None) not kernelized;
    # the reference forward with targets=None returns (logits, None).
    print("KERNEL_OK")
</pallas_src>

<mosaic_0001>
module attributes {stable_mosaic.version = 11 : i64} {
  func.func @ln_linear_kernel(%arg0: i32, %arg1: i32, %arg2: memref<32x64xbf16, #tpu.memory_space<vmem>>, %arg3: memref<1x64xf32, #tpu.memory_space<vmem>>, %arg4: memref<1x64xf32, #tpu.memory_space<vmem>>, %arg5: memref<64x192xbf16, #tpu.memory_space<vmem>>, %arg6: memref<1x192xf32, #tpu.memory_space<vmem>>, %arg7: memref<32x192xbf16, #tpu.memory_space<vmem>>, %arg8: memref<32x64xbf16, #tpu.memory_space<vmem>>) attributes {dimension_semantics = [#tpu.dimension_semantics<parallel>, #tpu.dimension_semantics<arbitrary>], iteration_bounds = array<i64: 1, 1>, scalar_prefetch = 0 : i64, scratch_operands = 1 : i64, tpu.core_type = #tpu.core_type<tc>, window_params = [{transform_indices = @transform_0, window_bounds = array<i64: 32, 64>}, {pipeline_mode = #tpu.pipeline_mode<synchronous>, transform_indices = @transform_1, window_bounds = array<i64: 1, 64>}, {pipeline_mode = #tpu.pipeline_mode<synchronous>, transform_indices = @transform_2, window_bounds = array<i64: 1, 64>}, {transform_indices = @transform_3, window_bounds = array<i64: 64, 192>}, {transform_indices = @transform_4, window_bounds = array<i64: 1, 192>}, {transform_indices = @transform_5, window_bounds = array<i64: 32, 192>}]} {
    %c0_i32 = arith.constant 0 : i32
    %0 = arith.cmpi eq, %arg1, %c0_i32 : i32
    %1 = arith.extui %0 : i1 to i32
    %c0_i32_0 = arith.constant 0 : i32
    %2 = arith.cmpi ne, %1, %c0_i32_0 : i32
    scf.if %2 {
      %c0_8 = arith.constant 0 : index
      %c0_9 = arith.constant 0 : index
      %11 = vector.load %arg2[%c0_8, %c0_9] : memref<32x64xbf16, #tpu.memory_space<vmem>>, vector<32x64xbf16>
      %12 = arith.extf %11 : vector<32x64xbf16> to vector<32x64xf32>
      %c0_10 = arith.constant 0 : index
      %c0_11 = arith.constant 0 : index
      %13 = vector.load %arg3[%c0_10, %c0_11] : memref<1x64xf32, #tpu.memory_space<vmem>>, vector<1x64xf32>
      %c0_12 = arith.constant 0 : index
      %c0_13 = arith.constant 0 : index
      %14 = vector.load %arg4[%c0_12, %c0_13] : memref<1x64xf32, #tpu.memory_space<vmem>>, vector<1x64xf32>
      %cst_14 = arith.constant dense<0.000000e+00> : vector<32xf32>
      %15 = vector.multi_reduction <add>, %12, %cst_14 [1] : vector<32x64xf32> to vector<32xf32>
      %16 = vector.shape_cast %15 : vector<32xf32> to vector<32x1xf32>
      %cst_15 = arith.constant 6.400000e+01 : f32
      %17 = vector.broadcast %cst_15 : f32 to vector<32x1xf32>
      %18 = arith.divf %16, %17 : vector<32x1xf32>
      %19 = vector.broadcast %18 : vector<32x1xf32> to vector<32x64xf32>
      %20 = arith.subf %12, %19 : vector<32x64xf32>
      %21 = arith.mulf %20, %20 : vector<32x64xf32>
      %cst_16 = arith.constant dense<0.000000e+00> : vector<32xf32>
      %22 = vector.multi_reduction <add>, %21, %cst_16 [1] : vector<32x64xf32> to vector<32xf32>
      %23 = vector.shape_cast %22 : vector<32xf32> to vector<32x1xf32>
      %cst_17 = arith.constant 6.400000e+01 : f32
      %24 = vector.broadcast %cst_17 : f32 to vector<32x1xf32>
      %25 = arith.divf %23, %24 : vector<32x1xf32>
      %cst_18 = arith.constant 9.99999974E-6 : f32
      %26 = vector.broadcast %cst_18 : f32 to vector<32x1xf32>
      %27 = arith.addf %25, %26 : vector<32x1xf32>
      %28 = math.rsqrt %27 : vector<32x1xf32>
      %29 = vector.broadcast %28 : vector<32x1xf32> to vector<32x64xf32>
      %30 = arith.mulf %20, %29 : vector<32x64xf32>
      %31 = vector.broadcast %13 : vector<1x64xf32> to vector<32x64xf32>
      %32 = arith.mulf %30, %31 : vector<32x64xf32>
      %33 = vector.broadcast %14 : vector<1x64xf32> to vector<32x64xf32>
      %34 = arith.addf %32, %33 : vector<32x64xf32>
      %35 = arith.truncf %34 : vector<32x64xf32> to vector<32x64xbf16>
      %c0_19 = arith.constant 0 : index
      %c0_20 = arith.constant 0 : index
      %36 = vector.load %arg8[%c0_19, %c0_20] : memref<32x64xbf16, #tpu.memory_space<vmem>>, vector<32x64xbf16>
      tpu.vector_store %arg8[%c0_19, %c0_20], %35 {strides = array<i32>} : memref<32x64xbf16, #tpu.memory_space<vmem>>, vector<32x64xbf16>,
    } else {
    }
    %c0 = arith.constant 0 : index
    %c0_1 = arith.constant 0 : index
    %3 = vector.load %arg8[%c0, %c0_1] : memref<32x64xbf16, #tpu.memory_space<vmem>>, vector<32x64xbf16>
    %c0_2 = arith.constant 0 : index
    %c0_3 = arith.constant 0 : index
    %4 = vector.load %arg5[%c0_2, %c0_3] : memref<64x192xbf16, #tpu.memory_space<vmem>>, vector<64x192xbf16>
    %cst = arith.constant dense<0.000000e+00> : vector<32x192xf32>
    %5 = tpu.matmul %3, %4, %cst {dimension_numbers = #tpu.dot_dimension_numbers<[1], [0], [0], [1], [0, 0, 1, 1], [], []>} : vector<32x64xbf16>, vector<64x192xbf16>, vector<32x192xf32> -> vector<32x192xf32>
    %c0_4 = arith.constant 0 : index
    %c0_5 = arith.constant 0 : index
    %6 = vector.load %arg6[%c0_4, %c0_5] : memref<1x192xf32, #tpu.memory_space<vmem>>, vector<1x192xf32>
    %7 = vector.broadcast %6 : vector<1x192xf32> to vector<32x192xf32>
    %8 = arith.addf %5, %7 : vector<32x192xf32>
    %9 = arith.truncf %8 : vector<32x192xf32> to vector<32x192xbf16>
    %c0_6 = arith.constant 0 : index
    %c0_7 = arith.constant 0 : index
    %10 = vector.load %arg7[%c0_6, %c0_7] : memref<32x192xbf16, #tpu.memory_space<vmem>>, vector<32x192xbf16>
    tpu.vector_store %arg7[%c0_6, %c0_7], %9 {strides = array<i32>} : memref<32x192xbf16, #tpu.memory_space<vmem>>, vector<32x192xbf16>,
    return
  }
  func.func @transform_0(%arg0: i32, %arg1: i32) -> (i32, i32) {
    %c0_i32 = arith.constant 0 : i32
    %c0_i32_0 = arith.constant 0 : i32
    return %arg0, %c0_i32 : i32, i32
  }
  func.func @transform_1(%arg0: i32, %arg1: i32) -> (i32, i32) {
    %c0_i32 = arith.constant 0 : i32
    %c0_i32_0 = arith.constant 0 : i32
    %c0_i32_1 = arith.constant 0 : i32
    return %c0_i32, %c0_i32_0 : i32, i32
  }
  func.func @transform_2(%arg0: i32, %arg1: i32) -> (i32, i32) {
    %c0_i32 = arith.constant 0 : i32
    %c0_i32_0 = arith.constant 0 : i32
    %c0_i32_1 = arith.constant 0 : i32
    return %c0_i32, %c0_i32_0 : i32, i32
  }
  func.func @transform_3(%arg0: i32, %arg1: i32) -> (i32, i32) {
    %c0_i32 = arith.constant 0 : i32
    %c0_i32_0 = arith.constant 0 : i32
    return %c0_i32, %arg1 : i32, i32
  }
  func.func @transform_4(%arg0: i32, %arg1: i32) -> (i32, i32) {
    %c0_i32 = arith.constant 0 : i32
    %c0_i32_0 = arith.constant 0 : i32
    return %c0_i32, %arg1 : i32, i32
  }
  func.func @transform_5(%arg0: i32, %arg1: i32) -> (i32, i32) {
    %c0_i32 = arith.constant 0 : i32
    return %arg0, %arg1 : i32, i32
  }
}

</mosaic_0001>

<llo_original>
// kernel: tpu_custom_call.1
$region0: #{tpu_custom_call.1}
  #allocation0 [shape = 'u32[]', space=smem, size = 0x4, offset = 0x4, fixed_abs, tag = 'smem constant byte address 0x4 - core index']
  #allocation1 [shape = 'u32[72,128]{1,0:T(1,128)}', space=vmem, size = 0x9000, scoped, tag = 'internal scratch']
  #allocation2 [shape = 'bf16[32,64]{1,0:T(8,128)(2,1)}', space=vmem, size = 0x2000, scoped, tag = 'scratch operand']
  %s0 = inlined_call_operand.hbm [shape: bf16[32,64], index: 0, kind: input, shape index: {}]
  %s1 = inlined_call_operand.hbm [shape: f32[1,64], index: 1, kind: input, shape index: {}]
  %s2 = inlined_call_operand.vmem [shape: f32[1,64], index: 2, kind: input, shape index: {}]
  %s3 = inlined_call_operand.hbm [shape: bf16[64,192], index: 3, kind: input, shape index: {}]
  %s4 = inlined_call_operand.vmem [shape: f32[1,192], index: 4, kind: input, shape index: {}]
  %s5 = inlined_call_operand.hbm [shape: bf16[32,192], index: 5, kind: output, shape index: {}]
  %s6 = sld [smem:[#allocation0]]
  $region46: #{tpu_custom_call.1} parent=0
    _
  %s8 = ssub.s32 1, %s6
  %s9 = scalar_select 0, %s8, %s6
  $region1: #{tpu_custom_call.1} parent=0
    #allocation3 [shape = 'u8[8192]{0}', space=vmem, size = 0x2000, scoped, tag = 'input window, operand 0, single buffered']
    #allocation4 [shape = 's32[1]{0}', space=sflag, size = 0x4, scoped, tag = 'scoped memory for tpu_custom_call.1']
    #allocation5 [shape = 's32[1]{0}', space=sflag, size = 0x4, scoped, tag = 'scoped memory for tpu_custom_call.1']
    #allocation6 [shape = 'u8[512]{0}', space=vmem, size = 0x400, scoped, tag = 'input window, operand 1, single buffered']
    #allocation7 [shape = 's32[1]{0}', space=sflag, size = 0x4, scoped, tag = 'scoped memory for tpu_custom_call.1']
    #allocation8 [shape = 'u8[32768]{0}', space=vmem, size = 0x8000, scoped, tag = 'input window, operand 3, single buffered']
    #allocation9 [shape = 'u8[16384]{0}', space=vmem, size = 0x4000, scoped, tag = 'output window, operand 0, single buffered']
    %10 = vsyncpa [#allocation4], 0
    %11 = vsyncpa [#allocation7], 0
    %12 = vsyncpa [#allocation5], 0
    // Predicated region
    $region2: #{tpu_custom_call.1} parent=1 // pred_check
      _
    $region3: #{tpu_custom_call.1} parent=1 // pred_check_branch
      %14 = sbr.rel (0) target = $region5
    $region4: #{tpu_custom_call.1} parent=1 // pred_region
      %16 = vsyncadd [#allocation4], 0
      %s17 = sshll.u32 %s0, 4
      %s18 = int_to_ptr.hbm [resolvable:$true] %s17
      %s19 = sshll.u32 [#allocation3], 4
      %s20 = int_to_ptr.vmem [resolvable:$true] %s19
      %25 = dma.hbm_to_vmem [thread:$0]  %s18, 256, %s20, [#allocation4], 64, 64, 4
    $region5: #{tpu_custom_call.1} parent=1 // pred_fallthru
      _
    // Predicated region
    $region6: #{tpu_custom_call.1} parent=1 // pred_check
      _
    $region7: #{tpu_custom_call.1} parent=1 // pred_check_branch
      %27 = sbr.rel (0) target = $region9
    $region8: #{tpu_custom_call.1} parent=1 // pred_region
      %29 = vsyncadd [#allocation7], 0
      %s31 = sshll.u32 %s1, 4
      %s32 = int_to_ptr.hbm [resolvable:$true] %s31
      %s33 = sshll.u32 [#allocation6], 4
      %s34 = int_to_ptr.vmem [resolvable:$true] %s33
      %36 = dma.hbm_to_vmem [thread:$0]  %s32, 16, %s34, [#allocation7]
    $region9: #{tpu_custom_call.1} parent=1 // pred_fallthru
      _
    // Predicated region
    $region10: #{tpu_custom_call.1} parent=1 // pred_check
      _
    $region11: #{tpu_custom_call.1} parent=1 // pred_check_branch
      %38 = sbr.rel (0) target = $region13
    $region12: #{tpu_custom_call.1} parent=1 // pred_region
      _
    $region13: #{tpu_custom_call.1} parent=1 // pred_fallthru
      _
    // Predicated region
    $region14: #{tpu_custom_call.1} parent=1 // pred_check
      _
    $region15: #{tpu_custom_call.1} parent=1 // pred_check_branch
      %40 = sbr.rel (0) target = $region17
    $region16: #{tpu_custom_call.1} parent=1 // pred_region
      %42 = vsyncadd [#allocation7], 0
      %s43 = sshll.u32 %s3, 4
      %s44 = int_to_ptr.hbm [resolvable:$true] %s43
      %s45 = sshll.u32 [#allocation8], 4
      %s46 = int_to_ptr.vmem [resolvable:$true] %s45
      %51 = dma.hbm_to_vmem [thread:$0]  %s44, 1024, %s46, [#allocation7], 128, 128, 8
    $region17: #{tpu_custom_call.1} parent=1 // pred_fallthru
      _
    // Predicated region
    $region18: #{tpu_custom_call.1} parent=1 // pred_check
      _
    $region19: #{tpu_custom_call.1} parent=1 // pred_check_branch
      %53 = sbr.rel (0) target = $region21
    $region20: #{tpu_custom_call.1} parent=1 // pred_region
      _
    $region21: #{tpu_custom_call.1} parent=1 // pred_fallthru
      _
    // Predicated region
    $region22: #{tpu_custom_call.1} parent=1 // pred_check
      _
    $region23: #{tpu_custom_call.1} parent=1 // pred_check_branch
      %55 = sbr.rel (0) target = $region25
    $region24: #{tpu_custom_call.1} parent=1 // pred_region
      %57 = dma.done [#allocation4], 256
    $region25: #{tpu_custom_call.1} parent=1 // pred_fallthru
      _
    // Predicated region
    $region26: #{tpu_custom_call.1} parent=1 // pred_check
      _
    $region27: #{tpu_custom_call.1} parent=1 // pred_check_branch
      %59 = sbr.rel (0) target = $region29
    $region28: #{tpu_custom_call.1} parent=1 // pred_region
      %61 = dma.done [#allocation7], 16
    $region29: #{tpu_custom_call.1} parent=1 // pred_fallthru
      _
    // Predicated region
    $region30: #{tpu_custom_call.1} parent=1 // pred_check
      _
    $region31: #{tpu_custom_call.1} parent=1 // pred_check_branch
      %63 = sbr.rel (0) target = $region33
    $region32: #{tpu_custom_call.1} parent=1 // pred_region
      %65 = dma.done [#allocation7], 1024
    $region33: #{tpu_custom_call.1} parent=1 // pred_fallthru
      _
    %p67 = scmp.eq.s32.totalorder 0, 0
    // Predicated region
    $region34: #{tpu_custom_call.1} parent=1 // pred_check
      %p68 = pneg %p67
    $region35: #{tpu_custom_call.1} parent=1 // pred_check_branch
      %70 = sbr.rel (%p68) target = $region37
    $region36: #{tpu_custom_call.1} parent=1 // pred_region
      %v71 = vld [vmem:[#allocation3] sm:$0xf]
      %v72 = vld [vmem:[#allocation3 + $0x4] sm:$0xf]
      %v73 = vld [vmem:[#allocation3 + $0x8] sm:$0xf]
      %v74 = vld [vmem:[#allocation3 + $0xc] sm:$0xf]
      %v75 = vunpack.c.l.bf16 %v71
      %v76 = vunpack.c.l.bf16 %v72
      %v77 = vunpack.c.l.bf16 %v73
      %v78 = vunpack.c.l.bf16 %v74
      %v79 = vld [vmem:[#allocation6] sm:$0x1]
      %v80 = vld [vmem:[%s2] sm:$0x1]
      %vm81 = vcmask 523264
      %v82 = vsel %vm81, %v75, 0.0
      %83 = vadd.xlane.f32.xlu0 %v82
      %v84 = vpop.xlane.xlu0 %83
      %v85 = vsel %vm81, %v76, 0.0
      %86 = vadd.xlane.f32.xlu0 %v85
      %v87 = vpop.xlane.xlu0 %86
      %v88 = vsel %vm81, %v77, 0.0
      %89 = vadd.xlane.f32.xlu0 %v88
      %v90 = vpop.xlane.xlu0 %89
      %v91 = vsel %vm81, %v78, 0.0
      %92 = vadd.xlane.f32.xlu0 %v91
      %v93 = vpop.xlane.xlu0 %92
      %v94 = vrcp.pop 64.0
      %v95 = vmul.f32 64.0, %v94
      %v96 = vsub.f32 1.0, %v95
      %v97 = vmul.f32 %v94, %v96
      %v98 = vadd.f32 %v94, %v97
      %vm99 = vweird.f32 %v94
      %v100 = vsel %vm99, %v94, %v98
      %v101 = vmul.f32 %v84, %v100
      %v102 = vmul.f32 %v87, %v100
      %v103 = vmul.f32 %v90, %v100
      %v104 = vmul.f32 %v93, %v100
      %v105 = vsub.f32 %v75, %v101
      %v106 = vsub.f32 %v76, %v102
      %v107 = vsub.f32 %v77, %v103
      %v108 = vsub.f32 %v78, %v104
      %v109 = vmul.f32 %v105, %v105
      %v110 = vmul.f32 %v106, %v106
      %v111 = vmul.f32 %v107, %v107
      %v112 = vmul.f32 %v108, %v108
      %v113 = vsel %vm81, %v109, 0.0
      %114 = vadd.xlane.f32.xlu0 %v113
      %v115 = vpop.xlane.xlu0 %114
      %v116 = vsel %vm81, %v110, 0.0
      %117 = vadd.xlane.f32.xlu0 %v116
      %v118 = vpop.xlane.xlu0 %117
      %v119 = vsel %vm81, %v111, 0.0
      %120 = vadd.xlane.f32.xlu0 %v119
      %v121 = vpop.xlane.xlu0 %120
      %v122 = vsel %vm81, %v112, 0.0
      %123 = vadd.xlane.f32.xlu0 %v122
      %v124 = vpop.xlane.xlu0 %123
      %v125 = vmul.f32 %v115, %v100
      %v126 = vmul.f32 %v118, %v100
      %v127 = vmul.f32 %v121, %v100
      %v128 = vmul.f32 %v124, %v100
      %v129 = vadd.f32 %v125, 1e-05
      %v130 = vadd.f32 %v126, 1e-05
      %v131 = vadd.f32 %v127, 1e-05
      %v132 = vadd.f32 %v128, 1e-05
      %v133 = vrsqrt.pop %v129
      %v134 = vmul.f32 %v133, %v129
      %v135 = vmul.f32 %v134, %v133
      %v136 = vmul.f32 0.5, %v135
      %v137 = vsub.f32 1.5, %v136
      %v138 = vmul.f32 %v133, %v137
      %vm139 = vweird.f32 %v129
      %vm140 = vweird.f32 %v133
      %vm141 = vmor %vm139, %vm140
      %v142 = vsel %vm141, %v133, %v138
      %v143 = vrsqrt.pop %v130
      %v144 = vmul.f32 %v143, %v130
      %v145 = vmul.f32 %v144, %v143
      %v146 = vmul.f32 0.5, %v145
      %v147 = vsub.f32 1.5, %v146
      %v148 = vmul.f32 %v143, %v147
      %vm149 = vweird.f32 %v130
      %vm150 = vweird.f32 %v143
      %vm151 = vmor %vm149, %vm150
      %v152 = vsel %vm151, %v143, %v148
      %v153 = vrsqrt.pop %v131
      %v154 = vmul.f32 %v153, %v131
      %v155 = vmul.f32 %v154, %v153
      %v156 = vmul.f32 0.5, %v155
      %v157 = vsub.f32 1.5, %v156
      %v158 = vmul.f32 %v153, %v157
      %vm159 = vweird.f32 %v131
      %vm160 = vweird.f32 %v153
      %vm161 = vmor %vm159, %vm160
      %v162 = vsel %vm161, %v153, %v158
      %v163 = vrsqrt.pop %v132
      %v164 = vmul.f32 %v163, %v132
      %v165 = vmul.f32 %v164, %v163
      %v166 = vmul.f32 0.5, %v165
      %v167 = vsub.f32 1.5, %v166
      %v168 = vmul.f32 %v163, %v167
      %vm169 = vweird.f32 %v132
      %vm170 = vweird.f32 %v163
      %vm171 = vmor %vm169, %vm170
      %v172 = vsel %vm171, %v163, %v168
      %v173 = vmul.f32 %v105, %v142
      %v174 = vmul.f32 %v106, %v152
      %v175 = vmul.f32 %v107, %v162
      %v176 = vmul.f32 %v108, %v172
      %v178 = vperm.slane %v79, 0
      %v180 = vmul.f32 %v173, %v178
      %v181 = vmul.f32 %v174, %v178
      %v182 = vmul.f32 %v175, %v178
      %v183 = vmul.f32 %v176, %v178
      %v185 = vperm.slane %v80, 0
      %v187 = vadd.f32 %v180, %v185
      %v188 = vadd.f32 %v181, %v185
      %v189 = vadd.f32 %v182, %v185
      %v190 = vadd.f32 %v183, %v185
      %v191 = vpack.c.bf16 %v187, %v187
      %v192 = vpack.c.bf16 %v188, %v188
      %v193 = vpack.c.bf16 %v189, %v189
      %v194 = vpack.c.bf16 %v190, %v190
      %vm195 = vcmask 519168
      %196 = vst.msk [vmem:[#allocation2] sm:$0xf] %vm195, %v191
      %197 = vst.msk [vmem:[#allocation2 + $0x4] sm:$0xf] %vm195, %v192
      %198 = vst.msk [vmem:[#allocation2 + $0x8] sm:$0xf] %vm195, %v193
      %199 = vst.msk [vmem:[#allocation2 + $0xc] sm:$0xf] %vm195, %v194
    $region37: #{tpu_custom_call.1} parent=1 // pred_fallthru
      _
    %v200 = vld [vmem:[#allocation2] sm:$0xf]
    %v201 = vld [vmem:[#allocation2 + $0x4] sm:$0xf]
    %v202 = vld [vmem:[#allocation2 + $0x8] sm:$0xf]
    %v203 = vld [vmem:[#allocation2 + $0xc] sm:$0xf]
    %v204 = vld [vmem:[#allocation8] sm:$0xff]
    %v205 = vld [vmem:[#allocation8 + $0x8] sm:$0xff]
    %v206 = vld [vmem:[#allocation8 + $0x10] sm:$0xff]
    %v207 = vld [vmem:[#allocation8 + $0x18] sm:$0xff]
    %v208 = vld [vmem:[#allocation8 + $0x20] sm:$0xff]
    %v209 = vld [vmem:[#allocation8 + $0x28] sm:$0xff]
    %v210 = vld [vmem:[#allocation8 + $0x30] sm:$0xff]
    %v211 = vld [vmem:[#allocation8 + $0x38] sm:$0xff]
    %v212 = vld [vmem:[%s4] sm:$0x3]
    %v214 = vperm.slane %v212, 0
    %v215 = vperm.slane %v212, 1
    %v222 = vunpack.c.l.b16 %v200
    %v223 = vunpack.c.l.b16 %v201
    %v224 = vunpack.c.l.b16 %v202
    %v225 = vunpack.c.l.b16 %v203
    %v226 = vpack.c.b16 %v223, %v222
    %v227 = vpack.c.b16 %v225, %v224
    %v236 = vunpack.c.l.b16 %v204
    %v237 = vunpack.c.h.b16 %v204
    %v238 = vunpack.c.l.b16 %v205
    %v239 = vunpack.c.h.b16 %v205
    %v240 = vunpack.c.l.b16 %v206
    %v241 = vunpack.c.h.b16 %v206
    %v242 = vunpack.c.l.b16 %v207
    %v243 = vunpack.c.h.b16 %v207
    %v244 = vunpack.c.l.b16 %v208
    %v245 = vunpack.c.h.b16 %v208
    %v246 = vunpack.c.l.b16 %v209
    %v247 = vunpack.c.h.b16 %v209
    %v248 = vunpack.c.l.b16 %v210
    %v249 = vunpack.c.h.b16 %v210
    %v250 = vunpack.c.l.b16 %v211
    %v251 = vunpack.c.h.b16 %v211
    %v252 = vpack.c.b16 %v238, %v236
    %v253 = vpack.c.b16 %v239, %v237
    %v254 = vpack.c.b16 %v242, %v240
    %v255 = vpack.c.b16 %v243, %v241
    %v256 = vpack.c.b16 %v246, %v244
    %v257 = vpack.c.b16 %v247, %v245
    %v258 = vpack.c.b16 %v250, %v248
    %v259 = vpack.c.b16 %v251, %v249
    %vm268 = vcmask 523264
    %v270 = vsel %vm268, %v226, 0
    %v273 = vsel %vm268, %v227, 0
    %275 = vmatpush.bf16.msra.mxu0 0
    %276 = vmatpush.bf16.msra.mxu0 0
    %277 = vmatpush.bf16.msra.mxu0 0
    %278 = vmatpush.bf16.msra.mxu0 0
    %279 = vmatpush.bf16.msra.mxu0 %v258
    %280 = vmatpush.bf16.msra.mxu0 %v256
    %281 = vmatpush.bf16.msra.mxu0 %v254
    %282 = vmatpush.bf16.msra.mxu0 %v252
    %283 = vmatmul.bf16.gmra.mxu0 %v270
    %v284 = vpop.f32.mrf.mxu0
    %v285 = vadd.f32 %v214, %v284
    %v286 = vpop.f32.mrf.mxu0
    %v287 = vadd.f32 %v214, %v286
    %288 = vmatmul.bf16.gmra.mxu0 %v273
    %v289 = vpop.f32.mrf.mxu0
    %v290 = vadd.f32 %v214, %v289
    %v291 = vpop.f32.mrf.mxu0
    %v292 = vadd.f32 %v214, %v291
    %293 = vdwg.mxu0
    %294 = vmatpush.bf16.msra.mxu0 0
    %295 = vmatpush.bf16.msra.mxu0 0
    %296 = vmatpush.bf16.msra.mxu0 0
    %297 = vmatpush.bf16.msra.mxu0 0
    %298 = vmatpush.bf16.msra.mxu0 %v259
    %299 = vmatpush.bf16.msra.mxu0 %v257
    %300 = vmatpush.bf16.msra.mxu0 %v255
    %301 = vmatpush.bf16.msra.mxu0 %v253
    %302 = vmatmul.bf16.gmra.mxu0 %v270
    %v303 = vpop.f32.mrf.mxu0
    %v304 = vadd.f32 %v215, %v303
    %v305 = vpop.f32.mrf.mxu0
    %v306 = vadd.f32 %v215, %v305
    %307 = vmatmul.bf16.gmra.mxu0 %v273
    %v308 = vpop.f32.mrf.mxu0
    %v309 = vadd.f32 %v215, %v308
    %v310 = vpop.f32.mrf.mxu0
    %v311 = vadd.f32 %v215, %v310
    %312 = vdwg.mxu0
    %v313 = vpack.c.bf16 %v304, %v285
    %v314 = vpack.c.bf16 %v306, %v287
    %v315 = vpack.c.bf16 %v309, %v290
    %v316 = vpack.c.bf16 %v311, %v292
    %vm317 = vcmask 1043456
    %vm318 = vcmask 523268
    %vm319 = vmor %vm318, %vm317
    %320 = vst.msk [vmem:[#allocation9] sm:$0xff] %vm319, %v313
    %321 = vst.msk [vmem:[#allocation9 + $0x8] sm:$0xff] %vm319, %v314
    %322 = vst.msk [vmem:[#allocation9 + $0x10] sm:$0xff] %vm319, %v315
    %323 = vst.msk [vmem:[#allocation9 + $0x18] sm:$0xff] %vm319, %v316
    // Predicated region
    $region38: #{tpu_custom_call.1} parent=1 // pred_check
      _
    $region39: #{tpu_custom_call.1} parent=1 // pred_check_branch
      %325 = sbr.rel (0) target = $region41
    $region40: #{tpu_custom_call.1} parent=1 // pred_region
      %327 = vsyncadd [#allocation5], 0
      %s328 = sshll.u32 [#allocation9], 4
      %s329 = int_to_ptr.vmem [resolvable:$true] %s328
      %s330 = sshll.u32 %s5, 4
      %s331 = int_to_ptr.hbm [resolvable:$true] %s330
      %336 = dma.vmem_to_hbm [thread:$0]  %s329, 512, %s331, [#allocation5], 128, 128, 8
    $region41: #{tpu_custom_call.1} parent=1 // pred_fallthru
      _
    // Predicated region
    $region42: #{tpu_custom_call.1} parent=1 // pred_check
      _
    $region43: #{tpu_custom_call.1} parent=1 // pred_check_branch
      %338 = sbr.rel (0) target = $region45
    $region44: #{tpu_custom_call.1} parent=1 // pred_region
      %340 = dma.done [#allocation5], 512
    $region45: #{tpu_custom_call.1} parent=1 // pred_fallthru
      _
    %341 = vsyncpa [#allocation4], 1
    %342 = vsyncpa [#allocation7], 1
    %343 = vsyncpa [#allocation5], 1

</llo_original>
